<compile_context>
chip_gen: v5e
topology: v5e:2x2
jax: 0.10.0
libtpu: 0.0.40
codegen_flags: <defaults>
</compile_context>

<pallas_src>
import functools

import jax
import jax.numpy as jnp
from jax import lax
from jax.experimental import pallas as pl
from jax.experimental.pallas import tpu as pltpu

LANES = 128
SUBLANES = 8
MAX_BLOCK_ROWS = 4096                   # (4096, 128) f32 = 2 MiB per input block
VMEM_LIMIT_BYTES = 48 * 1024 * 1024     # masked path fits on v5e..v7x

_CANONICAL = {
    "MSE": "MSE",
    "L1": "L1",
    "Huber": "HUBER1",      # torch default delta = 1.0
    "SmoothL1": "HUBER1",   # torch default beta = 1.0 -> identical piecewise form
    "CharbonnierLoss": "CHARB",
}


def _round_up(x, m):
    return ((x + m - 1) // m) * m


@functools.lru_cache(maxsize=None)
def _num_tensorcores():
    """Best-effort TensorCore count of the local chip (perf-only decision)."""
    try:
        info = pltpu.get_tpu_info()
        for name in ("num_cores", "core_count", "num_tensorcores",
                     "tensor_core_count"):
            v = getattr(info, name, None)
            if isinstance(v, int) and v > 0:
                return v
    except Exception:
        pass
    try:
        kind = jax.devices()[0].device_kind.lower()
    except Exception:
        return 1
    return 2 if ("v4" in kind or "v7" in kind or "7x" in kind) else 1


def _elementwise_error(d, fused_cfg):
    """sum_k w_k * per-element loss_k(d) in f32, with deduped / folded weights."""
    kinds = [k for k, _ in fused_cfg]
    ad = jnp.abs(d) if any(k in ("L1", "HUBER1") for k in kinds) else None
    sq = d * d if any(k in ("MSE", "HUBER1", "CHARB") for k in kinds) else None
    err = None
    for kind, w in fused_cfg:
        if kind == "MSE":
            term = sq
        elif kind == "L1":
            term = ad
        elif kind == "HUBER1":
            term = jnp.where(ad < 1.0, 0.5 * sq, ad - 0.5)
        elif kind == "CHARB":
            term = jnp.sqrt(sq + 1e-6)      # sqrt rides the EUP slot
        else:
            raise NotImplementedError(kind)
        wterm = term if w == 1.0 else jnp.float32(w) * term
        err = wterm if err is None else err + wterm
    return err


def _loss_kernel(*refs, fused_cfg, has_mask, binary_mask, has_tail,
                 needs_bounds, block_rows, grid_tiles, inner, tail_rem):
    if has_mask:
        x_ref, y_ref, m_ref, sum_ref, cnt_ref, acc_ref, acc_cnt_ref = refs
    else:
        x_ref, y_ref, sum_ref, acc_ref = refs
        m_ref = cnt_ref = acc_cnt_ref = None

    c = pl.program_id(0)          # parallel axis (core split on dual-TC chips)
    i = pl.program_id(1)          # reduction axis
    t = c * inner + i             # global tile id
    last_tile = grid_tiles - 1

    @pl.when(i == 0)
    def _init():
        acc_ref[...] = jnp.zeros_like(acc_ref)
        if has_mask:
            acc_cnt_ref[...] = jnp.zeros_like(acc_cnt_ref)

    def _err():
        x = x_ref[...].astype(jnp.float32)
        y = y_ref[...].astype(jnp.float32)
        return _elementwise_error(x - y, fused_cfg)

    def _accum_steady():
        # Steady-state tile: fully valid, no tail masking.
        err = _err()
        if has_mask:
            m = m_ref[...].astype(jnp.float32)
            if binary_mask:
                acc_ref[...] += err * m
                acc_cnt_ref[...] += m
            else:
                sel = m == 1.0
                acc_ref[...] += jnp.where(sel, err, 0.0)
                acc_cnt_ref[...] += jnp.where(sel, 1.0, 0.0)
        else:
            acc_ref[...] += err

    def _accum_tail():
        # Last tile only: discard wrapper padding and partial-block overhang.
        # tail_rem is a static Python int <= block_rows * LANES, so no global
        # offset (and no int32 overflow) is ever needed in-kernel.
        err = _err()
        row = lax.broadcasted_iota(jnp.int32, (block_rows, LANES), 0)
        col = lax.broadcasted_iota(jnp.int32, (block_rows, LANES), 1)
        valid = (row * LANES + col) < tail_rem
        if has_mask:
            m = m_ref[...].astype(jnp.float32)
            if binary_mask:
                # jnp.where (not multiply) so garbage (possibly NaN) in the
                # block overhang can never leak into the accumulators.
                acc_ref[...] += jnp.where(valid, err * m, 0.0)
                acc_cnt_ref[...] += jnp.where(valid, m, 0.0)
            else:
                sel = jnp.logical_and(valid, m == 1.0)
                acc_ref[...] += jnp.where(sel, err, 0.0)
                acc_cnt_ref[...] += jnp.where(sel, 1.0, 0.0)
        else:
            acc_ref[...] += jnp.where(valid, err, 0.0)

    if has_tail:
        if needs_bounds:
            steady = jnp.logical_and(t < grid_tiles, t != last_tile)
        else:
            steady = t != last_tile
        pl.when(steady)(_accum_steady)
        pl.when(t == last_tile)(_accum_tail)
    else:
        if needs_bounds:
            pl.when(t < grid_tiles)(_accum_steady)
        else:
            _accum_steady()

    @pl.when(i == inner - 1)
    def _finalize():
        # One-time in-kernel reduction of the wide VMEM accumulator down to a
        # tiny (8, 128) output block per core: no multi-MiB HBM writeback and
        # no second XLA reduction over a big slab.
        g = block_rows // SUBLANES
        sum_ref[...] = acc_ref[...].reshape(g, SUBLANES, LANES).sum(axis=0)
        if has_mask:
            cnt_ref[...] = acc_cnt_ref[...].reshape(g, SUBLANES, LANES).sum(axis=0)


def _to_slab(a, rows_padded):
    flat = a.reshape(-1)                 # free (bitcast) for contiguous inputs
    padded_n = rows_padded * LANES
    if flat.shape[0] != padded_n:
        # TODO(synk): for very large inputs with n % 1024 != 0 this pad is a
        # full HBM copy; a tiny jnp tail epilogue over the remainder would
        # avoid it.  Aligned sizes (the common case) take the no-copy path.
        flat = jnp.pad(flat, (0, padded_n - flat.shape[0]))
    return flat.reshape(rows_padded, LANES)


class Loss:
    """JAX/Pallas port of the PyTorch `Loss` module (forward only)."""

    def __init__(self, args):
        self.args = args
        self.loss = []
        for loss in args.loss.split("+"):
            weight, loss_type = loss.split("*")
            if loss_type not in _CANONICAL:
                raise NotImplementedError(loss_type)
            self.loss.append((float(weight), loss_type))
        # Dedupe identical loss terms (Huber == SmoothL1 at torch defaults) and
        # fold their weights so the kernel does minimum per-element VPU work.
        fused = {}
        for w, t in self.loss:
            key = _CANONICAL[t]
            fused[key] = fused.get(key, 0.0) + w
        self._fused = tuple(sorted(fused.items()))
        # 0/1 masks (the `mask == 1.0` convention) are applied as a float
        # multiply; set False to use the exact compare-based selection for
        # arbitrary-valued float masks.
        self.assume_binary_mask = True

    def __call__(self, out, gt, mask=None):
        n = int(out.size)
        has_mask = mask is not None

        rows = pl.cdiv(n, LANES)
        rows_padded = _round_up(rows, SUBLANES)          # (8,128)-tileable slab
        block_rows = min(MAX_BLOCK_ROWS, rows_padded)    # always a multiple of 8
        grid_tiles = pl.cdiv(rows_padded, block_rows)    # last tile may be partial
        covered = grid_tiles * block_rows * LANES
        has_tail = covered != n
        # Valid prefix length of the last tile (static Python int, <= block elems).
        tail_rem = n - (grid_tiles - 1) * block_rows * LANES

        n_par = 2 if (_num_tensorcores() >= 2 and grid_tiles >= 2) else 1
        inner = pl.cdiv(grid_tiles, n_par)
        needs_bounds = (n_par * inner != grid_tiles)

        x = _to_slab(out, rows_padded)
        y = _to_slab(gt, rows_padded)
        inputs = [x, y]
        if has_mask:
            inputs.append(_to_slab(mask, rows_padded))

        if needs_bounds:
            def in_map(c, i):
                return (jnp.minimum(c * inner + i, grid_tiles - 1), 0)
        else:
            def in_map(c, i):
                return (c * inner + i, 0)

        def out_map(c, i):
            return (c, 0)

        in_specs = [pl.BlockSpec((block_rows, LANES), in_map)] * len(inputs)
        out_shapes = [jax.ShapeDtypeStruct((n_par * SUBLANES, LANES), jnp.float32)]
        out_specs = [pl.BlockSpec((SUBLANES, LANES), out_map)]
        scratch = [pltpu.VMEM((block_rows, LANES), jnp.float32)]
        if has_mask:
            out_shapes.append(
                jax.ShapeDtypeStruct((n_par * SUBLANES, LANES), jnp.float32))
            out_specs.append(pl.BlockSpec((SUBLANES, LANES), out_map))
            scratch.append(pltpu.VMEM((block_rows, LANES), jnp.float32))

        kernel = functools.partial(
            _loss_kernel,
            fused_cfg=self._fused,
            has_mask=has_mask,
            binary_mask=self.assume_binary_mask,
            has_tail=has_tail,
            needs_bounds=needs_bounds,
            block_rows=block_rows,
            grid_tiles=grid_tiles,
            inner=inner,
            tail_rem=tail_rem,
        )

        results = pl.pallas_call(
            kernel,
            out_shape=tuple(out_shapes),
            grid_spec=pltpu.PrefetchScalarGridSpec(
                num_scalar_prefetch=0,
                grid=(n_par, inner),
                in_specs=in_specs,
                out_specs=tuple(out_specs),
                scratch_shapes=scratch,
            ),
            compiler_params=pltpu.CompilerParams(
                dimension_semantics=("parallel", "arbitrary"),
                vmem_limit_bytes=VMEM_LIMIT_BYTES),
        )(*inputs)

        if not isinstance(results, (tuple, list)):
            results = (results,)

        total = jnp.sum(results[0])
        if has_mask:
            # Empty selection -> nan, matching torch's mean over an empty tensor.
            return total / jnp.sum(results[1])
        return total / jnp.float32(n)


class _Args:
    loss = "1.0*MSE+0.5*L1+0.25*CharbonnierLoss+0.3*Huber+0.2*SmoothL1"
    local_rank = 0
    device = "tpu"


def _reference(out, gt, cfg, mask=None):
    d = (out - gt).astype(jnp.float32)
    ad, sq = jnp.abs(d), d * d
    if mask is None:
        sel = None
        cnt = jnp.float32(d.size)
    else:
        sel = mask == 1.0
        cnt = jnp.sum(sel.astype(jnp.float32))
    total = jnp.float32(0.0)
    for w, t in cfg:
        if t == "MSE":
            term = sq
        elif t == "L1":
            term = ad
        elif t in ("Huber", "SmoothL1"):
            term = jnp.where(ad < 1.0, 0.5 * sq, ad - 0.5)
        else:  # CharbonnierLoss
            term = jnp.sqrt(sq + 1e-6)
        if sel is not None:
            term = jnp.where(sel, term, 0.0)
        total = total + jnp.float32(w) * (jnp.sum(term) / cnt)
    return total


if __name__ == "__main__":
    args = _Args()
    loss_fn = Loss(args)

    key = jax.random.PRNGKey(0)
    k1, k2, k3, k4, k5, k6, k7, k8 = jax.random.split(key, 8)

    # 1) small, aligned, no mask (single-tile fast path, no mask stream)
    out = jax.random.normal(k1, (2, 4, 16, 16), dtype=jnp.float32)
    gt = jax.random.normal(k2, (2, 4, 16, 16), dtype=jnp.float32)
    res = loss_fn(out, gt)
    jax.block_until_ready(res)
    ref = _reference(out, gt, loss_fn.loss)
    assert jnp.allclose(res, ref, rtol=1e-4, atol=1e-5), (res, ref)

    # 2) small with a 0/1 mask: multiply-by-mask fast path ...
    mask = (jax.random.uniform(k3, (2, 4, 16, 16)) > 0.5).astype(jnp.float32)
    res_m = loss_fn(out, gt, mask=mask)
    jax.block_until_ready(res_m)
    ref_m = _reference(out, gt, loss_fn.loss, mask=mask)
    assert jnp.allclose(res_m, ref_m, rtol=1e-4, atol=1e-5), (res_m, ref_m)
    # ... and the exact compare-based mask path.
    loss_fn.assume_binary_mask = False
    res_me = loss_fn(out, gt, mask=mask)
    jax.block_until_ready(res_me)
    assert jnp.allclose(res_me, ref_m, rtol=1e-4, atol=1e-5), (res_me, ref_m)
    loss_fn.assume_binary_mask = True

    # 3) larger input: multi-tile grid, partial last block handled by the
    #    tail mask gated to the last tile only.
    out_l = jax.random.normal(k4, (2, 4, 384, 384), dtype=jnp.float32)
    gt_l = jax.random.normal(k5, (2, 4, 384, 384), dtype=jnp.float32)
    res_l = loss_fn(out_l, gt_l)
    jax.block_until_ready(res_l)
    ref_l = _reference(out_l, gt_l, loss_fn.loss)
    assert jnp.allclose(res_l, ref_l, rtol=1e-4, atol=1e-5), (res_l, ref_l)

    # 4) unaligned element count (1155): wrapper pad + in-kernel tail mask.
    out_u = jax.random.normal(k6, (3, 5, 7, 11), dtype=jnp.float32)
    gt_u = jax.random.normal(k7, (3, 5, 7, 11), dtype=jnp.float32)
    res_u = loss_fn(out_u, gt_u)
    jax.block_until_ready(res_u)
    ref_u = _reference(out_u, gt_u, loss_fn.loss)
    assert jnp.allclose(res_u, ref_u, rtol=1e-4, atol=1e-5), (res_u, ref_u)

    # 5) unaligned + mask: tail-and-mask branch.
    mask_u = (jax.random.uniform(k8, (3, 5, 7, 11)) > 0.5).astype(jnp.float32)
    res_um = loss_fn(out_u, gt_u, mask=mask_u)
    jax.block_until_ready(res_um)
    ref_um = _reference(out_u, gt_u, loss_fn.loss, mask=mask_u)
    assert jnp.allclose(res_um, ref_um, rtol=1e-4, atol=1e-5), (res_um, ref_um)

    print("KERNEL_OK")
</pallas_src>

<mosaic_0001>
module attributes {stable_mosaic.version = 11 : i64} {
  func.func @_loss_kernel(%arg0: i32, %arg1: i32, %arg2: memref<16x128xf32, #tpu.memory_space<vmem>>, %arg3: memref<16x128xf32, #tpu.memory_space<vmem>>, %arg4: memref<8x128xf32, #tpu.memory_space<vmem>>, %arg5: memref<16x128xf32, #tpu.memory_space<vmem>>) attributes {dimension_semantics = [#tpu.dimension_semantics<parallel>, #tpu.dimension_semantics<arbitrary>], iteration_bounds = array<i64: 1, 1>, scalar_prefetch = 0 : i64, scratch_operands = 1 : i64, tpu.core_type = #tpu.core_type<tc>, window_params = [{transform_indices = @transform_0, window_bounds = array<i64: 16, 128>}, {transform_indices = @transform_1, window_bounds = array<i64: 16, 128>}, {transform_indices = @transform_2, window_bounds = array<i64: 8, 128>}]} {
    %c0_i32 = arith.constant 0 : i32
    %0 = arith.cmpi eq, %arg1, %c0_i32 : i32
    %1 = arith.extui %0 : i1 to i32
    %c0_i32_0 = arith.constant 0 : i32
    %2 = arith.cmpi ne, %1, %c0_i32_0 : i32
    scf.if %2 {
      %cst_16 = arith.constant 0.000000e+00 : f32
      %33 = vector.broadcast %cst_16 : f32 to vector<16x128xf32>
      %c0_17 = arith.constant 0 : index
      %c0_18 = arith.constant 0 : index
      %34 = vector.load %arg5[%c0_17, %c0_18] : memref<16x128xf32, #tpu.memory_space<vmem>>, vector<16x128xf32>
      tpu.vector_store %arg5[%c0_17, %c0_18], %33 {strides = array<i32>} : memref<16x128xf32, #tpu.memory_space<vmem>>, vector<16x128xf32>,
    } else {
    }
    %c0 = arith.constant 0 : index
    %c0_1 = arith.constant 0 : index
    %3 = vector.load %arg2[%c0, %c0_1] : memref<16x128xf32, #tpu.memory_space<vmem>>, vector<16x128xf32>
    %c0_2 = arith.constant 0 : index
    %c0_3 = arith.constant 0 : index
    %4 = vector.load %arg3[%c0_2, %c0_3] : memref<16x128xf32, #tpu.memory_space<vmem>>, vector<16x128xf32>
    %5 = arith.subf %3, %4 : vector<16x128xf32>
    %6 = math.absf %5 : vector<16x128xf32>
    %7 = arith.mulf %5, %5 : vector<16x128xf32>
    %cst = arith.constant 9.99999997E-7 : f32
    %8 = vector.broadcast %cst : f32 to vector<16x128xf32>
    %9 = arith.addf %7, %8 : vector<16x128xf32>
    %10 = math.sqrt %9 : vector<16x128xf32>
    %cst_4 = arith.constant 2.500000e-01 : f32
    %11 = vector.broadcast %cst_4 : f32 to vector<16x128xf32>
    %12 = arith.mulf %11, %10 : vector<16x128xf32>
    %cst_5 = arith.constant 1.000000e+00 : f32
    %13 = vector.broadcast %cst_5 : f32 to vector<16x128xf32>
    %14 = arith.cmpf olt, %6, %13 : vector<16x128xf32>
    %cst_6 = arith.constant 5.000000e-01 : f32
    %15 = vector.broadcast %cst_6 : f32 to vector<16x128xf32>
    %16 = arith.mulf %15, %7 : vector<16x128xf32>
    %cst_7 = arith.constant 5.000000e-01 : f32
    %17 = vector.broadcast %cst_7 : f32 to vector<16x128xf32>
    %18 = arith.subf %6, %17 : vector<16x128xf32>
    %19 = arith.select %14, %16, %18 : vector<16x128xi1>, vector<16x128xf32>
    %cst_8 = arith.constant 5.000000e-01 : f32
    %20 = vector.broadcast %cst_8 : f32 to vector<16x128xf32>
    %21 = arith.mulf %20, %19 : vector<16x128xf32>
    %22 = arith.addf %12, %21 : vector<16x128xf32>
    %cst_9 = arith.constant 5.000000e-01 : f32
    %23 = vector.broadcast %cst_9 : f32 to vector<16x128xf32>
    %24 = arith.mulf %23, %6 : vector<16x128xf32>
    %25 = arith.addf %22, %24 : vector<16x128xf32>
    %26 = arith.addf %25, %7 : vector<16x128xf32>
    %c0_10 = arith.constant 0 : index
    %c0_11 = arith.constant 0 : index
    %27 = vector.load %arg5[%c0_10, %c0_11] : memref<16x128xf32, #tpu.memory_space<vmem>>, vector<16x128xf32>
    %28 = arith.addf %27, %26 : vector<16x128xf32>
    %c0_12 = arith.constant 0 : index
    %c0_13 = arith.constant 0 : index
    %29 = vector.load %arg5[%c0_12, %c0_13] : memref<16x128xf32, #tpu.memory_space<vmem>>, vector<16x128xf32>
    tpu.vector_store %arg5[%c0_12, %c0_13], %28 {strides = array<i32>} : memref<16x128xf32, #tpu.memory_space<vmem>>, vector<16x128xf32>,
    %c0_i32_14 = arith.constant 0 : i32
    %30 = arith.cmpi eq, %arg1, %c0_i32_14 : i32
    %31 = arith.extui %30 : i1 to i32
    %c0_i32_15 = arith.constant 0 : i32
    %32 = arith.cmpi ne, %31, %c0_i32_15 : i32
    scf.if %32 {
      %c0_16 = arith.constant 0 : index
      %c0_17 = arith.constant 0 : index
      %33 = vector.load %arg5[%c0_16, %c0_17] : memref<16x128xf32, #tpu.memory_space<vmem>>, vector<16x128xf32>
      %34 = vector.shape_cast %33 : vector<16x128xf32> to vector<2x8x128xf32>
      %cst_18 = arith.constant dense<0.000000e+00> : vector<8x128xf32>
      %35 = vector.multi_reduction <add>, %34, %cst_18 [0] : vector<2x8x128xf32> to vector<8x128xf32>
      %c0_19 = arith.constant 0 : index
      %c0_20 = arith.constant 0 : index
      %36 = vector.load %arg4[%c0_19, %c0_20] : memref<8x128xf32, #tpu.memory_space<vmem>>, vector<8x128xf32>
      tpu.vector_store %arg4[%c0_19, %c0_20], %35 {strides = array<i32>} : memref<8x128xf32, #tpu.memory_space<vmem>>, vector<8x128xf32>,
    } else {
    }
    return
  }
  func.func @transform_0(%arg0: i32, %arg1: i32) -> (i32, i32) {
    %c1_i32 = arith.constant 1 : i32
    %0 = arith.muli %arg0, %c1_i32 : i32
    %1 = arith.addi %0, %arg1 : i32
    %c0_i32 = arith.constant 0 : i32
    %c0_i32_0 = arith.constant 0 : i32
    return %1, %c0_i32 : i32, i32
  }
  func.func @transform_1(%arg0: i32, %arg1: i32) -> (i32, i32) {
    %c1_i32 = arith.constant 1 : i32
    %0 = arith.muli %arg0, %c1_i32 : i32
    %1 = arith.addi %0, %arg1 : i32
    %c0_i32 = arith.constant 0 : i32
    %c0_i32_0 = arith.constant 0 : i32
    return %1, %c0_i32 : i32, i32
  }
  func.func @transform_2(%arg0: i32, %arg1: i32) -> (i32, i32) {
    %c0_i32 = arith.constant 0 : i32
    %c0_i32_0 = arith.constant 0 : i32
    return %arg0, %c0_i32 : i32, i32
  }
}

</mosaic_0001>

<llo_original>
// kernel: tpu_custom_call.1
$region0: #{tpu_custom_call.1}
  #allocation0 [shape = 'u32[]', space=smem, size = 0x4, offset = 0x4, fixed_abs, tag = 'smem constant byte address 0x4 - core index']
  #allocation1 [shape = 'u32[72,128]{1,0:T(1,128)}', space=vmem, size = 0x9000, scoped, tag = 'internal scratch']
  #allocation2 [shape = 'f32[16,128]{1,0:T(8,128)}', space=vmem, size = 0x2000, scoped, tag = 'scratch operand']
  %s0 = inlined_call_operand.hbm [shape: f32[16,128], index: 0, kind: input, shape index: {}]
  %s1 = inlined_call_operand.hbm [shape: f32[16,128], index: 1, kind: input, shape index: {}]
  %s2 = inlined_call_operand.hbm [shape: f32[8,128], index: 2, kind: output, shape index: {}]
  %s3 = sld [smem:[#allocation0]]
  $region34: #{tpu_custom_call.1} parent=0
    _
  %s5 = ssub.s32 1, %s3
  %s6 = scalar_select 0, %s5, %s3
  $region1: #{tpu_custom_call.1} parent=0
    #allocation3 [shape = 'u8[8192]{0}', space=vmem, size = 0x2000, scoped, tag = 'input window, operand 0, single buffered']
    #allocation4 [shape = 's32[1]{0}', space=sflag, size = 0x4, scoped, tag = 'scoped memory for tpu_custom_call.1']
    #allocation5 [shape = 's32[1]{0}', space=sflag, size = 0x4, scoped, tag = 'scoped memory for tpu_custom_call.1']
    #allocation6 [shape = 'u8[8192]{0}', space=vmem, size = 0x2000, scoped, tag = 'input window, operand 1, single buffered']
    #allocation7 [shape = 's32[1]{0}', space=sflag, size = 0x4, scoped, tag = 'scoped memory for tpu_custom_call.1']
    #allocation8 [shape = 'u8[4096]{0}', space=vmem, size = 0x1000, scoped, tag = 'output window, operand 0, single buffered']
    %7 = vsyncpa [#allocation4], 0
    %8 = vsyncpa [#allocation7], 0
    %9 = vsyncpa [#allocation5], 0
    // Predicated region
    $region2: #{tpu_custom_call.1} parent=1 // pred_check
      _
    $region3: #{tpu_custom_call.1} parent=1 // pred_check_branch
      %11 = sbr.rel (0) target = $region5
    $region4: #{tpu_custom_call.1} parent=1 // pred_region
      %s12 = sadd.s32 0, 0
      %s13 = smul.u32 2, %s12
      %15 = vsyncadd [#allocation4], 0
      %s16 = smul.addr %s13, 8
      %s17 = scalar_lea.hbm %s0, %s16
      %s18 = sshll.u32 %s17, 4
      %s19 = int_to_ptr.hbm [resolvable:$true] %s18
      %s20 = sshll.u32 [#allocation3], 4
      %s21 = int_to_ptr.vmem [resolvable:$true] %s20
      %26 = dma.hbm_to_vmem [thread:$0]  %s19, 256, %s21, [#allocation4], 128, 128, 8
    $region5: #{tpu_custom_call.1} parent=1 // pred_fallthru
      _
    // Predicated region
    $region6: #{tpu_custom_call.1} parent=1 // pred_check
      _
    $region7: #{tpu_custom_call.1} parent=1 // pred_check_branch
      %28 = sbr.rel (0) target = $region9
    $region8: #{tpu_custom_call.1} parent=1 // pred_region
      %s29 = sadd.s32 0, 0
      %s30 = smul.u32 2, %s29
      %32 = vsyncadd [#allocation7], 0
      %s33 = smul.addr %s30, 8
      %s34 = scalar_lea.hbm %s1, %s33
      %s35 = sshll.u32 %s34, 4
      %s36 = int_to_ptr.hbm [resolvable:$true] %s35
      %s37 = sshll.u32 [#allocation6], 4
      %s38 = int_to_ptr.vmem [resolvable:$true] %s37
      %43 = dma.hbm_to_vmem [thread:$0]  %s36, 256, %s38, [#allocation7], 128, 128, 8
    $region9: #{tpu_custom_call.1} parent=1 // pred_fallthru
      _
    // Predicated region
    $region10: #{tpu_custom_call.1} parent=1 // pred_check
      _
    $region11: #{tpu_custom_call.1} parent=1 // pred_check_branch
      %45 = sbr.rel (0) target = $region13
    $region12: #{tpu_custom_call.1} parent=1 // pred_region
      %47 = dma.done [#allocation4], 256
    $region13: #{tpu_custom_call.1} parent=1 // pred_fallthru
      _
    // Predicated region
    $region14: #{tpu_custom_call.1} parent=1 // pred_check
      _
    $region15: #{tpu_custom_call.1} parent=1 // pred_check_branch
      %49 = sbr.rel (0) target = $region17
    $region16: #{tpu_custom_call.1} parent=1 // pred_region
      %51 = dma.done [#allocation7], 256
    $region17: #{tpu_custom_call.1} parent=1 // pred_fallthru
      _
    %s52 = sadd.s32 0, 0
    %s53 = smul.u32 2, %s52
    %s54 = sadd.s32 0, 0
    %s55 = smul.u32 2, %s54
    %p56 = scmp.eq.s32.totalorder 0, 0
    // Predicated region
    $region18: #{tpu_custom_call.1} parent=1 // pred_check
      %p57 = pneg %p56
    $region19: #{tpu_custom_call.1} parent=1 // pred_check_branch
      %59 = sbr.rel (%p57) target = $region21
    $region20: #{tpu_custom_call.1} parent=1 // pred_region
      %60 = vst [vmem:[#allocation2] sm:$0xff] 0.0
      %61 = vst [vmem:[#allocation2 + $0x8] sm:$0xff] 0.0
    $region21: #{tpu_custom_call.1} parent=1 // pred_fallthru
      _
    %v62 = vld [vmem:[#allocation3] sm:$0xff]
    %v63 = vld [vmem:[#allocation3 + $0x8] sm:$0xff]
    %v64 = vld [vmem:[#allocation6] sm:$0xff]
    %v65 = vld [vmem:[#allocation6 + $0x8] sm:$0xff]
    %v66 = vsub.f32 %v62, %v64
    %v67 = vsub.f32 %v63, %v65
    %v68 = vand.u32 2147483647, %v66
    %v69 = vand.u32 2147483647, %v67
    %v70 = vmul.f32 %v66, %v66
    %v71 = vmul.f32 %v67, %v67
    %v72 = vadd.f32 %v70, 1e-06
    %v73 = vadd.f32 %v71, 1e-06
    %v74 = vrsqrt.pop %v72
    %v75 = vmul.f32 %v74, %v72
    %v76 = vmul.f32 %v75, %v74
    %v77 = vmul.f32 0.5, %v76
    %v78 = vsub.f32 1.5, %v77
    %v79 = vmul.f32 %v74, %v78
    %v80 = vmul.f32 %v72, %v79
    %vm81 = vcmp.eq.f32.partialorder %v72, inf
    %v82 = vsel %vm81, %v72, %v80
    %vm83 = vcmp.eq.f32.partialorder %v72, 0.0
    %v84 = vand.u32 %v72, 2147483648
    %v85 = vsel %vm83, %v84, %v82
    %v86 = vrsqrt.pop %v73
    %v87 = vmul.f32 %v86, %v73
    %v88 = vmul.f32 %v87, %v86
    %v89 = vmul.f32 0.5, %v88
    %v90 = vsub.f32 1.5, %v89
    %v91 = vmul.f32 %v86, %v90
    %v92 = vmul.f32 %v73, %v91
    %vm93 = vcmp.eq.f32.partialorder %v73, inf
    %v94 = vsel %vm93, %v73, %v92
    %vm95 = vcmp.eq.f32.partialorder %v73, 0.0
    %v96 = vand.u32 %v73, 2147483648
    %v97 = vsel %vm95, %v96, %v94
    %v98 = vmul.f32 %v85, 0.25
    %v99 = vmul.f32 %v97, 0.25
    %vm100 = vcmp.lt.f32.partialorder %v68, 1.0
    %vm101 = vcmp.lt.f32.partialorder %v69, 1.0
    %v102 = vmul.f32 %v70, 0.5
    %v103 = vmul.f32 %v71, 0.5
    %v104 = vsub.f32 %v68, 0.5
    %v105 = vsub.f32 %v69, 0.5
    %v106 = vsel %vm100, %v102, %v104
    %v107 = vsel %vm101, %v103, %v105
    %v108 = vmul.f32 %v106, 0.5
    %v109 = vmul.f32 %v107, 0.5
    %v110 = vadd.f32 %v98, %v108
    %v111 = vadd.f32 %v99, %v109
    %v112 = vmul.f32 %v68, 0.5
    %v113 = vmul.f32 %v69, 0.5
    %v114 = vadd.f32 %v110, %v112
    %v115 = vadd.f32 %v111, %v113
    %v116 = vadd.f32 %v114, %v70
    %v117 = vadd.f32 %v115, %v71
    %v118 = vld [vmem:[#allocation2] sm:$0xff]
    %v119 = vld [vmem:[#allocation2 + $0x8] sm:$0xff]
    %v120 = vadd.f32 %v118, %v116
    %v121 = vadd.f32 %v119, %v117
    %122 = vst [vmem:[#allocation2] sm:$0xff] %v120
    %123 = vst [vmem:[#allocation2 + $0x8] sm:$0xff] %v121
    // Predicated region
    $region22: #{tpu_custom_call.1} parent=1 // pred_check
      %p124 = pneg %p56
    $region23: #{tpu_custom_call.1} parent=1 // pred_check_branch
      %126 = sbr.rel (%p124) target = $region25
    $region24: #{tpu_custom_call.1} parent=1 // pred_region
      %v127 = vld [vmem:[#allocation2] sm:$0xff]
      %v128 = vld [vmem:[#allocation2 + $0x8] sm:$0xff]
      %v129 = vadd.f32 %v127, %v128
      %130 = vst [vmem:[#allocation8] sm:$0xff] %v129
    $region25: #{tpu_custom_call.1} parent=1 // pred_fallthru
      _
    // Predicated region
    $region26: #{tpu_custom_call.1} parent=1 // pred_check
      _
    $region27: #{tpu_custom_call.1} parent=1 // pred_check_branch
      %132 = sbr.rel (0) target = $region29
    $region28: #{tpu_custom_call.1} parent=1 // pred_region
      %134 = vsyncadd [#allocation5], 0
      %s136 = sshll.u32 [#allocation8], 4
      %s137 = int_to_ptr.vmem [resolvable:$true] %s136
      %s138 = sshll.u32 %s2, 4
      %s139 = int_to_ptr.hbm [resolvable:$true] %s138
      %141 = dma.vmem_to_hbm [thread:$0]  %s137, 128, %s139, [#allocation5]
    $region29: #{tpu_custom_call.1} parent=1 // pred_fallthru
      _
    // Predicated region
    $region30: #{tpu_custom_call.1} parent=1 // pred_check
      _
    $region31: #{tpu_custom_call.1} parent=1 // pred_check_branch
      %143 = sbr.rel (0) target = $region33
    $region32: #{tpu_custom_call.1} parent=1 // pred_region
      %145 = dma.done [#allocation5], 128
    $region33: #{tpu_custom_call.1} parent=1 // pred_fallthru
      _
    %146 = vsyncpa [#allocation4], 1
    %147 = vsyncpa [#allocation7], 1
    %148 = vsyncpa [#allocation5], 1

</llo_original>
